<compile_context>
chip_gen: v7x
topology: tpu7x:2x2x1
jax: 0.10.0
libtpu: 0.0.40
codegen_flags: <defaults>
</compile_context>

<pallas_src>
import jax
import jax.numpy as jnp
from jax.experimental import pallas as pl
from jax.experimental.pallas import tpu as pltpu

BN_EPS = 1e-5
LANE = 128
VMEM_TILE_BUDGET = 8 * 1024 * 1024   # per-step double-buffered working-set target
MAX_THW_UNITS = 64                   # cap tiles at 64 * 128 = 8192 output columns
MIN_TOTAL_TILES = 4                  # keep both v7x TensorCores busy when possible


def _round_up(x, m):
    return ((x + m - 1) // m) * m


# --------------------------------------------------------------------------- #
# Kernels
# --------------------------------------------------------------------------- #
def _stats_kernel(p_ref, w_ref, psum_ref, pm2_ref):
    """Per-tile conv^T + per-channel sum / centred sum-of-squares.

    p_ref: (K, THW) bf16   w_ref: (Cout, K) bf16
    psum_ref, pm2_ref: (Cout, 1) f32 per-tile partials (Chan-combined in JAX).
    """
    conv = jnp.dot(w_ref[...], p_ref[...], preferred_element_type=jnp.float32)
    thw = conv.shape[1]
    s = jnp.sum(conv, axis=1, keepdims=True)               # (Cout, 1)
    mu = s * (1.0 / thw)
    d = conv - mu
    psum_ref[...] = s
    pm2_ref[...] = jnp.sum(d * d, axis=1, keepdims=True)   # centred 2nd moment


def _apply_kernel(p_ref, w_ref, scale_ref, shift_ref, o_ref):
    """Recompute conv^T, apply folded BN affine + ReLU, lane-dense NCHW store.

    o_ref: (Cout, THW) f32 block of the (N, Cout, H*W) output.  All VPU math f32.
    """
    conv = jnp.dot(w_ref[...], p_ref[...], preferred_element_type=jnp.float32)
    o_ref[...] = jnp.maximum(conv * scale_ref[...] + shift_ref[...], 0.0)


# --------------------------------------------------------------------------- #
# Host-side helpers
# --------------------------------------------------------------------------- #
def _im2col_t(x, kh, kw, pad):
    """x: (N, Cin, H, W) -> patches (N, Cin*kh*kw, H*W); K ordered (cin, ky, kx).

    Transposed layout: pad + stack + view reshape, no XLA transpose."""
    n, cin, h, w = x.shape
    xp = jnp.pad(x, ((0, 0), (0, 0), (pad, pad), (pad, pad)))
    cols = [xp[:, :, dy:dy + h, dx:dx + w] for dy in range(kh) for dx in range(kw)]
    patches = jnp.stack(cols, axis=2)                 # (N, Cin, KH*KW, H, W)
    return patches.reshape(n, cin * kh * kw, h * w)   # contiguous-merge reshape


def _choose_thw(hw, k, cout, n_batch):
    """Pick the HW-tile width (lane dim of every block).

    Largest divisor of HW that (a) is a multiple of 128 (lane-dense loads and
    stores), (b) keeps the double-buffered, sublane-padded working set under the
    VMEM budget, and (c) leaves >= MIN_TOTAL_TILES grid steps so the 'parallel'
    grid shards over both v7x TensorCores.  If HW is not a multiple of 128 we
    fall back to one full-HW tile per image (full trailing dim is always legal).
    """
    if hw % LANE != 0:
        # TODO(synk): support zero-padded HW tiling for huge non-128-multiple
        # spatial sizes (needs padded-row-aware statistics + output slice).
        return hw
    units = hw // LANE
    bytes_per_unit = LANE * (
        2 * 2 * _round_up(k, 16)        # bf16 patches tile, double-buffered
        + 2 * 4 * _round_up(cout, 8)    # f32 output tile, double-buffered
        + 4 * _round_up(cout, 8)        # f32 conv intermediate (registers/VMEM)
    )
    cap = max(1, min(MAX_THW_UNITS, VMEM_TILE_BUDGET // bytes_per_unit))
    candidates = [d for d in range(1, units + 1) if units % d == 0 and d <= cap]
    good = [d for d in candidates if n_batch * (units // d) >= MIN_TOTAL_TILES]
    return LANE * (max(good) if good else max(candidates))


# --------------------------------------------------------------------------- #
# Wrapper
# --------------------------------------------------------------------------- #
@jax.jit
def conv2d_bn_relu(x_nchw, conv_w, conv_b, gamma, beta):
    """x_nchw: (N, Cin, H, W); conv_w: (Cout, Cin, KH, KW); conv_b/gamma/beta: (Cout,).

    Returns NCHW (N, Cout, H, W): stride=1 'same' conv, training-mode BatchNorm
    (batch statistics) + affine, ReLU."""
    n, cin, h, w = x_nchw.shape
    cout, cin_w, kh, kw = conv_w.shape
    assert cin == cin_w
    pad = kh // 2
    hw = h * w
    k = cin * kh * kw

    thw = _choose_thw(hw, k, cout, n)
    t_hw = hw // thw
    assert t_hw * thw == hw

    # bf16 MXU operands; every accumulation / VPU op stays f32 (v5e-safe).
    patches = _im2col_t(x_nchw.astype(jnp.bfloat16), kh, kw, pad)   # (N, K, HW)
    w_t = conv_w.astype(jnp.bfloat16).reshape(cout, k)              # (Cout, K)

    # Conv bias is a mathematical no-op under training-mode BatchNorm (the batch
    # mean absorbs it exactly), so it is intentionally not applied.
    del conv_b

    f32 = jnp.float32
    common_params = pltpu.CompilerParams(
        dimension_semantics=("parallel", "parallel"),
        vmem_limit_bytes=32 * 1024 * 1024,
    )
    patch_spec = pl.BlockSpec((None, k, thw), lambda b, t: (b, 0, t))
    w_spec = pl.BlockSpec((cout, k), lambda b, t: (0, 0))

    # ---- Pass 1: per-tile per-channel sum + centred sum-of-squares ---------- #
    cost1 = pl.CostEstimate(
        flops=2 * n * hw * k * cout + 4 * n * hw * cout,
        transcendentals=0,
        bytes_accessed=n * k * hw * 2 + cout * k * 2 + 2 * n * t_hw * cout * 4,
    )
    psum, pm2 = pl.pallas_call(
        _stats_kernel,
        out_shape=(
            jax.ShapeDtypeStruct((n, t_hw, cout, 1), f32),
            jax.ShapeDtypeStruct((n, t_hw, cout, 1), f32),
        ),
        grid_spec=pltpu.PrefetchScalarGridSpec(
            num_scalar_prefetch=0,
            grid=(n, t_hw),
            in_specs=[patch_spec, w_spec],
            out_specs=(
                pl.BlockSpec((None, None, cout, 1), lambda b, t: (b, t, 0, 0)),
                pl.BlockSpec((None, None, cout, 1), lambda b, t: (b, t, 0, 0)),
            ),
        ),
        compiler_params=common_params,
        cost_estimate=cost1,
    )(patches, w_t)

    # ---- Tiny JAX step: Chan-combine stats -> folded BN (scale, shift) ------ #
    m_total = n * hw
    sums = psum[..., 0]                                   # (N, T, Cout)
    m2s = pm2[..., 0]
    mean = jnp.sum(sums, axis=(0, 1)) / m_total           # (Cout,)
    tile_mu = sums / thw
    m2 = jnp.sum(m2s, axis=(0, 1)) + thw * jnp.sum((tile_mu - mean) ** 2, axis=(0, 1))
    var = m2 / m_total                                    # biased variance (as BN uses)
    inv_std = jax.lax.rsqrt(var + BN_EPS)
    g = gamma.astype(f32)
    scale = (g * inv_std).reshape(cout, 1)
    shift = (beta.astype(f32) - mean * g * inv_std).reshape(cout, 1)

    # ---- Pass 2: recompute conv, folded BN affine + ReLU, NCHW-layout store - #
    cost2 = pl.CostEstimate(
        flops=2 * n * hw * k * cout + 3 * n * hw * cout,
        transcendentals=0,
        bytes_accessed=n * k * hw * 2 + cout * k * 2 + n * cout * hw * 4,
    )
    out3 = pl.pallas_call(
        _apply_kernel,
        out_shape=jax.ShapeDtypeStruct((n, cout, hw), f32),
        grid_spec=pltpu.PrefetchScalarGridSpec(
            num_scalar_prefetch=0,
            grid=(n, t_hw),
            in_specs=[
                patch_spec,
                w_spec,
                pl.BlockSpec((cout, 1), lambda b, t: (0, 0)),
                pl.BlockSpec((cout, 1), lambda b, t: (0, 0)),
            ],
            out_specs=pl.BlockSpec((None, cout, thw), lambda b, t: (b, 0, t)),
        ),
        compiler_params=common_params,
        cost_estimate=cost2,
    )(patches, w_t, scale, shift)

    # Free reshape: (N, Cout, H*W) -> (N, Cout, H, W).  No transpose, no slice.
    return out3.reshape(n, cout, h, w)


# --------------------------------------------------------------------------- #
if __name__ == "__main__":
    # Small shapes consistent with the module (kernel=3, stride=1, pad=1).
    N, CIN, H, W = 2, 4, 16, 16
    COUT, KH, KW = 64, 3, 3

    key = jax.random.PRNGKey(0)
    k_x, k_w, k_b, k_g, k_be = jax.random.split(key, 5)

    x = jax.random.normal(k_x, (N, CIN, H, W), dtype=jnp.float32)
    conv_w = 0.1 * jax.random.normal(k_w, (COUT, CIN, KH, KW), dtype=jnp.float32)
    conv_b = 0.1 * jax.random.normal(k_b, (COUT,), dtype=jnp.float32)
    gamma = 1.0 + 0.1 * jax.random.normal(k_g, (COUT,), dtype=jnp.float32)
    beta = 0.1 * jax.random.normal(k_be, (COUT,), dtype=jnp.float32)

    out = conv2d_bn_relu(x, conv_w, conv_b, gamma, beta)
    out = jax.block_until_ready(out)

    assert out.shape == (N, COUT, H, W)
    assert bool(jnp.all(jnp.isfinite(out)))
    assert bool(jnp.all(out >= 0.0))  # ReLU sanity
    print("KERNEL_OK")
</pallas_src>

<mosaic_0001>
module attributes {stable_mosaic.version = 11 : i64} {
  func.func @_stats_kernel(%arg0: i32, %arg1: i32, %arg2: memref<1x36x128xbf16, #tpu.memory_space<vmem>>, %arg3: memref<64x36xbf16, #tpu.memory_space<vmem>>, %arg4: memref<1x1x64x1xf32, #tpu.memory_space<vmem>>, %arg5: memref<1x1x64x1xf32, #tpu.memory_space<vmem>>) attributes {dimension_semantics = [#tpu.dimension_semantics<parallel>, #tpu.dimension_semantics<parallel>], iteration_bounds = array<i64: 2, 2>, scalar_prefetch = 0 : i64, scratch_operands = 0 : i64, tpu.core_type = #tpu.core_type<tc>, window_params = [{transform_indices = @transform_0, window_bounds = array<i64: 1, 36, 128>}, {pipeline_mode = #tpu.pipeline_mode<synchronous>, transform_indices = @transform_1, window_bounds = array<i64: 64, 36>}, {transform_indices = @transform_2, window_bounds = array<i64: 1, 1, 64, 1>}, {transform_indices = @transform_3, window_bounds = array<i64: 1, 1, 64, 1>}]} {
    %c0 = arith.constant 0 : index
    %c0_0 = arith.constant 0 : index
    %0 = vector.load %arg3[%c0, %c0_0] : memref<64x36xbf16, #tpu.memory_space<vmem>>, vector<64x36xbf16>
    %c0_1 = arith.constant 0 : index
    %c0_2 = arith.constant 0 : index
    %c0_3 = arith.constant 0 : index
    %1 = vector.load %arg2[%c0_1, %c0_2, %c0_3] : memref<1x36x128xbf16, #tpu.memory_space<vmem>>, vector<1x36x128xbf16>
    %2 = vector.shape_cast %1 : vector<1x36x128xbf16> to vector<36x128xbf16>
    %cst = arith.constant dense<0.000000e+00> : vector<64x128xf32>
    %3 = tpu.matmul %0, %2, %cst {dimension_numbers = #tpu.dot_dimension_numbers<[1], [0], [0], [1], [0, 0, 1, 1], [], []>} : vector<64x36xbf16>, vector<36x128xbf16>, vector<64x128xf32> -> vector<64x128xf32>
    %cst_4 = arith.constant dense<0.000000e+00> : vector<64xf32>
    %4 = vector.multi_reduction <add>, %3, %cst_4 [1] : vector<64x128xf32> to vector<64xf32>
    %5 = vector.shape_cast %4 : vector<64xf32> to vector<64x1xf32>
    %cst_5 = arith.constant 7.812500e-03 : f32
    %6 = vector.broadcast %cst_5 : f32 to vector<64x1xf32>
    %7 = arith.mulf %5, %6 : vector<64x1xf32>
    %8 = vector.broadcast %7 : vector<64x1xf32> to vector<64x128xf32>
    %9 = arith.subf %3, %8 : vector<64x128xf32>
    %c0_6 = arith.constant 0 : index
    %c0_7 = arith.constant 0 : index
    %c0_8 = arith.constant 0 : index
    %c0_9 = arith.constant 0 : index
    %10 = vector.load %arg4[%c0_6, %c0_7, %c0_8, %c0_9] : memref<1x1x64x1xf32, #tpu.memory_space<vmem>>, vector<1x1x64x1xf32>
    %11 = vector.shape_cast %10 : vector<1x1x64x1xf32> to vector<64x1xf32>
    %12 = vector.shape_cast %5 : vector<64x1xf32> to vector<1x1x64x1xf32>
    tpu.vector_store %arg4[%c0_6, %c0_7, %c0_8, %c0_9], %12 {strides = array<i32>} : memref<1x1x64x1xf32, #tpu.memory_space<vmem>>, vector<1x1x64x1xf32>,
    %13 = arith.mulf %9, %9 : vector<64x128xf32>
    %cst_10 = arith.constant dense<0.000000e+00> : vector<64xf32>
    %14 = vector.multi_reduction <add>, %13, %cst_10 [1] : vector<64x128xf32> to vector<64xf32>
    %15 = vector.shape_cast %14 : vector<64xf32> to vector<64x1xf32>
    %c0_11 = arith.constant 0 : index
    %c0_12 = arith.constant 0 : index
    %c0_13 = arith.constant 0 : index
    %c0_14 = arith.constant 0 : index
    %16 = vector.load %arg5[%c0_11, %c0_12, %c0_13, %c0_14] : memref<1x1x64x1xf32, #tpu.memory_space<vmem>>, vector<1x1x64x1xf32>
    %17 = vector.shape_cast %16 : vector<1x1x64x1xf32> to vector<64x1xf32>
    %18 = vector.shape_cast %15 : vector<64x1xf32> to vector<1x1x64x1xf32>
    tpu.vector_store %arg5[%c0_11, %c0_12, %c0_13, %c0_14], %18 {strides = array<i32>} : memref<1x1x64x1xf32, #tpu.memory_space<vmem>>, vector<1x1x64x1xf32>,
    return
  }
  func.func @transform_0(%arg0: i32, %arg1: i32) -> (i32, i32, i32) {
    %c0_i32 = arith.constant 0 : i32
    %c0_i32_0 = arith.constant 0 : i32
    return %arg0, %c0_i32, %arg1 : i32, i32, i32
  }
  func.func @transform_1(%arg0: i32, %arg1: i32) -> (i32, i32) {
    %c0_i32 = arith.constant 0 : i32
    %c0_i32_0 = arith.constant 0 : i32
    %c0_i32_1 = arith.constant 0 : i32
    return %c0_i32, %c0_i32_0 : i32, i32
  }
  func.func @transform_2(%arg0: i32, %arg1: i32) -> (i32, i32, i32, i32) {
    %c0_i32 = arith.constant 0 : i32
    %c0_i32_0 = arith.constant 0 : i32
    %c0_i32_1 = arith.constant 0 : i32
    return %arg0, %arg1, %c0_i32, %c0_i32_0 : i32, i32, i32, i32
  }
  func.func @transform_3(%arg0: i32, %arg1: i32) -> (i32, i32, i32, i32) {
    %c0_i32 = arith.constant 0 : i32
    %c0_i32_0 = arith.constant 0 : i32
    %c0_i32_1 = arith.constant 0 : i32
    return %arg0, %arg1, %c0_i32, %c0_i32_0 : i32, i32, i32, i32
  }
}

module attributes {stable_mosaic.version = 11 : i64} {
  func.func @_apply_kernel(%arg0: i32, %arg1: i32, %arg2: memref<1x36x128xbf16, #tpu.memory_space<vmem>>, %arg3: memref<64x36xbf16, #tpu.memory_space<vmem>>, %arg4: memref<64x1xf32, #tpu.memory_space<vmem>>, %arg5: memref<64x1xf32, #tpu.memory_space<vmem>>, %arg6: memref<1x64x128xf32, #tpu.memory_space<vmem>>) attributes {dimension_semantics = [#tpu.dimension_semantics<parallel>, #tpu.dimension_semantics<parallel>], iteration_bounds = array<i64: 2, 2>, scalar_prefetch = 0 : i64, scratch_operands = 0 : i64, tpu.core_type = #tpu.core_type<tc>, window_params = [{transform_indices = @transform_0, window_bounds = array<i64: 1, 36, 128>}, {pipeline_mode = #tpu.pipeline_mode<synchronous>, transform_indices = @transform_1, window_bounds = array<i64: 64, 36>}, {pipeline_mode = #tpu.pipeline_mode<synchronous>, transform_indices = @transform_2, window_bounds = array<i64: 64, 1>}, {pipeline_mode = #tpu.pipeline_mode<synchronous>, transform_indices = @transform_3, window_bounds = array<i64: 64, 1>}, {transform_indices = @transform_4, window_bounds = array<i64: 1, 64, 128>}]} {
    %c0 = arith.constant 0 : index
    %c0_0 = arith.constant 0 : index
    %0 = vector.load %arg3[%c0, %c0_0] : memref<64x36xbf16, #tpu.memory_space<vmem>>, vector<64x36xbf16>
    %c0_1 = arith.constant 0 : index
    %c0_2 = arith.constant 0 : index
    %c0_3 = arith.constant 0 : index
    %1 = vector.load %arg2[%c0_1, %c0_2, %c0_3] : memref<1x36x128xbf16, #tpu.memory_space<vmem>>, vector<1x36x128xbf16>
    %2 = vector.shape_cast %1 : vector<1x36x128xbf16> to vector<36x128xbf16>
    %cst = arith.constant dense<0.000000e+00> : vector<64x128xf32>
    %3 = tpu.matmul %0, %2, %cst {dimension_numbers = #tpu.dot_dimension_numbers<[1], [0], [0], [1], [0, 0, 1, 1], [], []>} : vector<64x36xbf16>, vector<36x128xbf16>, vector<64x128xf32> -> vector<64x128xf32>
    %c0_4 = arith.constant 0 : index
    %c0_5 = arith.constant 0 : index
    %4 = vector.load %arg4[%c0_4, %c0_5] : memref<64x1xf32, #tpu.memory_space<vmem>>, vector<64x1xf32>
    %5 = vector.broadcast %4 : vector<64x1xf32> to vector<64x128xf32>
    %6 = arith.mulf %3, %5 : vector<64x128xf32>
    %c0_6 = arith.constant 0 : index
    %c0_7 = arith.constant 0 : index
    %7 = vector.load %arg5[%c0_6, %c0_7] : memref<64x1xf32, #tpu.memory_space<vmem>>, vector<64x1xf32>
    %8 = vector.broadcast %7 : vector<64x1xf32> to vector<64x128xf32>
    %9 = arith.addf %6, %8 : vector<64x128xf32>
    %cst_8 = arith.constant 0.000000e+00 : f32
    %10 = vector.broadcast %cst_8 : f32 to vector<64x128xf32>
    %11 = arith.maximumf %9, %10 : vector<64x128xf32>
    %c0_9 = arith.constant 0 : index
    %c0_10 = arith.constant 0 : index
    %c0_11 = arith.constant 0 : index
    %12 = vector.load %arg6[%c0_9, %c0_10, %c0_11] : memref<1x64x128xf32, #tpu.memory_space<vmem>>, vector<1x64x128xf32>
    %13 = vector.shape_cast %12 : vector<1x64x128xf32> to vector<64x128xf32>
    %14 = vector.shape_cast %11 : vector<64x128xf32> to vector<1x64x128xf32>
    tpu.vector_store %arg6[%c0_9, %c0_10, %c0_11], %14 {strides = array<i32>} : memref<1x64x128xf32, #tpu.memory_space<vmem>>, vector<1x64x128xf32>,
    return
  }
  func.func @transform_0(%arg0: i32, %arg1: i32) -> (i32, i32, i32) {
    %c0_i32 = arith.constant 0 : i32
    %c0_i32_0 = arith.constant 0 : i32
    return %arg0, %c0_i32, %arg1 : i32, i32, i32
  }
  func.func @transform_1(%arg0: i32, %arg1: i32) -> (i32, i32) {
    %c0_i32 = arith.constant 0 : i32
    %c0_i32_0 = arith.constant 0 : i32
    %c0_i32_1 = arith.constant 0 : i32
    return %c0_i32, %c0_i32_0 : i32, i32
  }
  func.func @transform_2(%arg0: i32, %arg1: i32) -> (i32, i32) {
    %c0_i32 = arith.constant 0 : i32
    %c0_i32_0 = arith.constant 0 : i32
    %c0_i32_1 = arith.constant 0 : i32
    return %c0_i32, %c0_i32_0 : i32, i32
  }
  func.func @transform_3(%arg0: i32, %arg1: i32) -> (i32, i32) {
    %c0_i32 = arith.constant 0 : i32
    %c0_i32_0 = arith.constant 0 : i32
    %c0_i32_1 = arith.constant 0 : i32
    return %c0_i32, %c0_i32_0 : i32, i32
  }
  func.func @transform_4(%arg0: i32, %arg1: i32) -> (i32, i32, i32) {
    %c0_i32 = arith.constant 0 : i32
    %c0_i32_0 = arith.constant 0 : i32
    return %arg0, %c0_i32, %arg1 : i32, i32, i32
  }
}

</mosaic_0001>

<llo_original>
// kernel: conv2d_bn_relu.2
$region0: #{conv2d_bn_relu.2}
  #allocation0 [shape = 'u32[]', space=smem, size = 0x4, offset = 0x4, fixed_abs, tag = 'smem constant byte address 0x4 - core index']
  #allocation1 [shape = 'u32[144,128]{1,0:T(1,128)}', space=vmem, size = 0x12000, scoped, tag = 'internal scratch']
  %s0 = inlined_call_operand.vmem [shape: bf16[2,36,256], index: 0, kind: input, shape index: {}]
  %s1 = inlined_call_operand.vmem [shape: bf16[64,36], index: 1, kind: input, shape index: {}]
  %s2 = inlined_call_operand.vmem [shape: f32[2,2,64,1], index: 2, kind: output, shape index: {0}]
  %s3 = inlined_call_operand.vmem [shape: f32[2,2,64,1], index: 3, kind: output, shape index: {1}]
  %4 = xla_tuple %s2, %s3
  %s5 = sld [smem:[#allocation0]]
  $region90: #{conv2d_bn_relu.2} parent=0
    _
  %s7 = ssub.s32 1, %s5
  %s8 = scalar_select 0, %s7, %s5
  $region1: #{conv2d_bn_relu.2} parent=0
    #allocation2 [shape = 'u8[20480]{0}', space=vmem, size = 0x5000, scoped, tag = 'input window, operand 0']
    loop: start=0, step=1, limit=6
    $region2: #{conv2d_bn_relu.2} parent=1 // loop_pre_header
      _
    $region3: #{conv2d_bn_relu.2} parent=1 // loop_header
      %s10 = sphi 0, %s14
      %p11 = scmp.ge.s32.totalorder %s10, 6
      %s17 = sphi 0, %s29
      %s18 = sphi 0, %s25
      %s19 = sphi 0, %s17
      %s20 = sphi 0, %s18
      %s21 = sphi 0, %s19
      %s22 = sphi 0, %s20
      %s34 = sphi 0, %s36
      %s37 = sphi 0, %s34
      %s38 = sphi 0, %s37
      %s54 = sphi 0, %s38
      %s58 = sphi 0, %s58
      %s60 = sphi 0, %s58
      %s61 = sphi 0, %s60
      %s75 = sphi 0, %s61
      %s83 = sphi 0, %s85
      %s86 = sphi 0, %s83
      %s87 = sphi 0, %s86
      %s103 = sphi 0, %s87
      %s111 = sphi 0, %s113
      %s114 = sphi 0, %s111
      %s115 = sphi 0, %s114
      %s131 = sphi 0, %s115
    $region4: #{conv2d_bn_relu.2} parent=1 // loop_header_branch
      %13 = sbr.rel (%p11) target = $region8
    $region5: #{conv2d_bn_relu.2} parent=1 // loop_body
      %s15 = ssub.s32 %s10, 1
      %s16 = ssub.s32 %s10, 2
      %s23 = sadd.s32 1, %s18
      %p24 = scmp.ge.s32.totalorder %s23, 2
      %s25 = scalar_select %p24, 0, %s23
      %s26 = sadd.s32 1, %s17
      %s27 = scalar_select %p24, %s26, %s17
      %p28 = scmp.ge.s32.totalorder %s27, 2
      %s29 = scalar_select %p28, 0, %s27
      %s30 = ssub.s32 %s17, %s29
      %s31 = ssub.s32 %s18, %s25
      %s32 = sor.u32 %s30, %s31
      %p33 = scmp.eq.s32.totalorder %s32, 0
      %s35 = sadd.s32 %s34, 1
      %s36 = scalar_select %p33, %s34, %s35
      %p39 = pneg %p33
      %p40 = scmp.eq.s32.totalorder %s10, 3
      %p41 = por %p39, %p40
      %p42 = scmp.ne.s32.totalorder %s34, %s37
      %p43 = scmp.eq.s32.totalorder %s10, 0
      %p44 = por %p42, %p43
      %p45 = scmp.ne.s32.totalorder %s34, %s37
      %p46 = scmp.eq.s32.totalorder %s15, 3
      %p47 = por %p45, %p46
      %p48 = scmp.ne.s32.totalorder %s37, %s38
      %p49 = scmp.eq.s32.totalorder %s15, 0
      %p50 = por %p48, %p49
      %p51 = scmp.ne.s32.totalorder %s37, %s38
      %p52 = scmp.eq.s32.totalorder %s16, 3
      %p53 = por %p51, %p52
      %p55 = scmp.ne.s32.totalorder %s38, %s54
      %p56 = scmp.eq.s32.totalorder %s16, 0
      %p57 = por %p55, %p56
      %s59 = sadd.s32 %s58, 1
      %p62 = scmp.eq.s32.totalorder %s10, 3
      %p63 = scmp.ne.s32.totalorder %s58, %s60
      %p64 = scmp.eq.s32.totalorder %s10, 0
      %p65 = por %p63, %p64
      %p66 = scmp.ne.s32.totalorder %s58, %s60
      %p67 = scmp.eq.s32.totalorder %s15, 3
      %p68 = por %p66, %p67
      %p69 = scmp.ne.s32.totalorder %s60, %s61
      %p70 = scmp.eq.s32.totalorder %s15, 0
      %p71 = por %p69, %p70
      %p72 = scmp.ne.s32.totalorder %s60, %s61
      %p73 = scmp.eq.s32.totalorder %s16, 3
      %p74 = por %p72, %p73
      %p76 = scmp.ne.s32.totalorder %s61, %s75
      %p77 = scmp.eq.s32.totalorder %s16, 0
      %p78 = por %p76, %p77
      %s79 = ssub.s32 %s17, %s29
      %s80 = ssub.s32 %s18, %s25
      %s81 = sor.u32 %s79, %s80
      %p82 = scmp.eq.s32.totalorder %s81, 0
      %s84 = sadd.s32 %s83, 1
      %s85 = scalar_select %p82, %s83, %s84
      %p88 = pneg %p82
      %p89 = scmp.eq.s32.totalorder %s10, 3
      %p90 = por %p88, %p89
      %p91 = scmp.ne.s32.totalorder %s83, %s86
      %p92 = scmp.eq.s32.totalorder %s10, 0
      %p93 = por %p91, %p92
      %p94 = scmp.ne.s32.totalorder %s83, %s86
      %p95 = scmp.eq.s32.totalorder %s15, 3
      %p96 = por %p94, %p95
      %p97 = scmp.ne.s32.totalorder %s86, %s87
      %p98 = scmp.eq.s32.totalorder %s15, 0
      %p99 = por %p97, %p98
      %p100 = scmp.ne.s32.totalorder %s86, %s87
      %p101 = scmp.eq.s32.totalorder %s16, 3
      %p102 = por %p100, %p101
      %p104 = scmp.ne.s32.totalorder %s87, %s103
      %p105 = scmp.eq.s32.totalorder %s16, 0
      %p106 = por %p104, %p105
      %s107 = ssub.s32 %s17, %s29
      %s108 = ssub.s32 %s18, %s25
      %s109 = sor.u32 %s107, %s108
      %p110 = scmp.eq.s32.totalorder %s109, 0
      %s112 = sadd.s32 %s111, 1
      %s113 = scalar_select %p110, %s111, %s112
      %p116 = pneg %p110
      %p117 = scmp.eq.s32.totalorder %s10, 3
      %p118 = por %p116, %p117
      %p119 = scmp.ne.s32.totalorder %s111, %s114
      %p120 = scmp.eq.s32.totalorder %s10, 0
      %p121 = por %p119, %p120
      %p122 = scmp.ne.s32.totalorder %s111, %s114
      %p123 = scmp.eq.s32.totalorder %s15, 3
      %p124 = por %p122, %p123
      %p125 = scmp.ne.s32.totalorder %s114, %s115
      %p126 = scmp.eq.s32.totalorder %s15, 0
      %p127 = por %p125, %p126
      %p128 = scmp.ne.s32.totalorder %s114, %s115
      %p129 = scmp.eq.s32.totalorder %s16, 3
      %p130 = por %p128, %p129
      %p132 = scmp.ne.s32.totalorder %s115, %s131
      %p133 = scmp.eq.s32.totalorder %s16, 0
      %p134 = por %p132, %p133
      %p135 = scmp.le.s32.totalorder 1, %s10
      %p136 = scmp.lt.s32.totalorder %s10, 5
      %p137 = pnand %p135, %p136
      %p138 = pneg %p137
      // Predicated region
      $region9: #{conv2d_bn_relu.2} parent=5 // pred_check
        _
      $region10: #{conv2d_bn_relu.2} parent=5 // pred_check_branch
        %140 = sbr.rel (%p137) target = $region12
      $region11: #{conv2d_bn_relu.2} parent=5 // pred_region
        %s141 = ssub.s32 %s10, 1
        // Predicated region
        $region13: #{conv2d_bn_relu.2} parent=11 // pred_check
          %p142 = pneg %p71
        $region14: #{conv2d_bn_relu.2} parent=11 // pred_check_branch
          %144 = sbr.rel (%p142) target = $region16
        $region15: #{conv2d_bn_relu.2} parent=11 // pred_region
          _
        $region16: #{conv2d_bn_relu.2} parent=11 // pred_fallthru
          _
      $region12: #{conv2d_bn_relu.2} parent=5 // pred_fallthru
        _
      %p145 = scmp.lt.s32.totalorder %s10, 4
      // Predicated region
      $region17: #{conv2d_bn_relu.2} parent=5 // pred_check
        %p146 = pneg %p145
      $region18: #{conv2d_bn_relu.2} parent=5 // pred_check_branch
        %148 = sbr.rel (%p146) target = $region20
      $region19: #{conv2d_bn_relu.2} parent=5 // pred_region
        // Predicated region
        $region21: #{conv2d_bn_relu.2} parent=19 // pred_check
          %p149 = pneg %p44
        $region22: #{conv2d_bn_relu.2} parent=19 // pred_check_branch
          %151 = sbr.rel (%p149) target = $region24
        $region23: #{conv2d_bn_relu.2} parent=19 // pred_region
          %s152 = sand.u32 %s34, 1
          %s153 = sand.u32 %s34, 1
          %s154 = smul.addr %s153, 20
          %s155 = scalar_lea.vmem [#allocation2], %s154
          %s156 = smul.addr %s17, 10
          %s157 = sadd.s32 %s18, %s156
          %s158 = smul.addr %s157, 4
          %s159 = scalar_lea.vmem %s0, %s158
          // Predicated region
          $region25: #{conv2d_bn_relu.2} parent=23 // pred_check
            _
          $region26: #{conv2d_bn_relu.2} parent=23 // pred_check_branch
            %161 = sbr.rel (0) target = $region28
          $region27: #{conv2d_bn_relu.2} parent=23 // pred_region
            // Predicated region
            $region29: #{conv2d_bn_relu.2} parent=27 // pred_check
              _
            $region30: #{conv2d_bn_relu.2} parent=27 // pred_check_branch
              %163 = sbr.rel target = $region32
            $region31: #{conv2d_bn_relu.2} parent=27 // pred_region
              // Predicated region
              $region44: #{conv2d_bn_relu.2} parent=31 // pred_check
                _
              $region45: #{conv2d_bn_relu.2} parent=31 // pred_check_branch
                %186 = sbr.rel (0) target = $region47
              $region46: #{conv2d_bn_relu.2} parent=31 // pred_region
                loop: start=0, step=1, limit=1
                $region48: #{conv2d_bn_relu.2} parent=46 // loop_pre_header
                  _
                $region49: #{conv2d_bn_relu.2} parent=46 // loop_header
                  %s188 = sphi 0, %s192
                  %p189 = scmp.ge.s32.totalorder %s188, 1
                  %s193 = sphi %s159, %s159
                  %s194 = sphi %s155, %s155
                $region50: #{conv2d_bn_relu.2} parent=46 // loop_header_branch
                  %191 = sbr.rel (%p189) target = $region54
                $region51: #{conv2d_bn_relu.2} parent=46 // loop_body
                  _
                $region52: #{conv2d_bn_relu.2} parent=46 // loop_footer
                  %s192 = sadd.s32 1, %s188
                $region53: #{conv2d_bn_relu.2} parent=46 // loop_footer_branch
                  %187 = sbr.rel target = $region49
                $region54: #{conv2d_bn_relu.2} parent=46 // loop_exit
                  _
                loop: start=0, step=1, limit=1
                $region55: #{conv2d_bn_relu.2} parent=46 // loop_pre_header
                  _
                $region56: #{conv2d_bn_relu.2} parent=46 // loop_header
                  %s197 = sphi 0, %s201
                  %p198 = scmp.ge.s32.totalorder %s197, 1
                  %s202 = sphi %s159, %s159
                  %s203 = sphi %s155, %s155
                $region57: #{conv2d_bn_relu.2} parent=46 // loop_header_branch
                  %200 = sbr.rel (%p198) target = $region61
                $region58: #{conv2d_bn_relu.2} parent=46 // loop_body
                  %v204 = vld [vmem:[%s202] sm:$0xf]
                  %205 = vst [vmem:[%s203] sm:$0xf] %v204
                  %v206 = vld [vmem:[%s202 + $0x8] sm:$0xf]
                  %207 = vst [vmem:[%s203 + $0x4] sm:$0xf] %v206
                  %v208 = vld [vmem:[%s202 + $0x10] sm:$0xf]
                  %209 = vst [vmem:[%s203 + $0x8] sm:$0xf] %v208
                  %v210 = vld [vmem:[%s202 + $0x18] sm:$0xf]
                  %211 = vst [vmem:[%s203 + $0xc] sm:$0xf] %v210
                  %v212 = vld [vmem:[%s202 + $0x20] sm:$0xf]
                  %213 = vst [vmem:[%s203 + $0x10] sm:$0xf] %v212
                $region59: #{conv2d_bn_relu.2} parent=46 // loop_footer
                  %s201 = sadd.s32 1, %s197
                $region60: #{conv2d_bn_relu.2} parent=46 // loop_footer_branch
                  %196 = sbr.rel target = $region56
                $region61: #{conv2d_bn_relu.2} parent=46 // loop_exit
                  _
              $region47: #{conv2d_bn_relu.2} parent=31 // pred_fallthru
                _
            $region32: #{conv2d_bn_relu.2} parent=27 // pred_fallthru
              _
            // Predicated region
            $region33: #{conv2d_bn_relu.2} parent=27 // pred_check
              _
            $region34: #{conv2d_bn_relu.2} parent=27 // pred_check_branch
              %165 = sbr.rel (0) target = $region36
            $region35: #{conv2d_bn_relu.2} parent=27 // pred_region
              loop: start=0, step=1, limit=1
              $region37: #{conv2d_bn_relu.2} parent=35 // loop_pre_header
                _
              $region38: #{conv2d_bn_relu.2} parent=35 // loop_header
                %s168 = sphi 0, %s172
                %p169 = scmp.ge.s32.totalorder %s168, 1
                %s173 = sphi %s159, %s159
                %s174 = sphi %s155, %s155
              $region39: #{conv2d_bn_relu.2} parent=35 // loop_header_branch
                %171 = sbr.rel (%p169) target = $region43
              $region40: #{conv2d_bn_relu.2} parent=35 // loop_body
                %v175 = vld [vmem:[%s173] sm:$0xf]
                %176 = vst [vmem:[%s174] sm:$0xf] %v175
                %v177 = vld [vmem:[%s173 + $0x8] sm:$0xf]
                %178 = vst [vmem:[%s174 + $0x4] sm:$0xf] %v177
                %v179 = vld [vmem:[%s173 + $0x10] sm:$0xf]
                %180 = vst [vmem:[%s174 + $0x8] sm:$0xf] %v179
                %v181 = vld [vmem:[%s173 + $0x18] sm:$0xf]
                %182 = vst [vmem:[%s174 + $0xc] sm:$0xf] %v181
                %v183 = vld [vmem:[%s173 + $0x20] sm:$0xf]
                %184 = vst [vmem:[%s174 + $0x10] sm:$0xf] %v183
              $region41: #{conv2d_bn_relu.2} parent=35 // loop_footer
                %s172 = sadd.s32 1, %s168
              $region42: #{conv2d_bn_relu.2} parent=35 // loop_footer_branch
                %167 = sbr.rel target = $region38
              $region43: #{conv2d_bn_relu.2} parent=35 // loop_exit
                _
            $region36: #{conv2d_bn_relu.2} parent=27 // pred_fallthru
              _
          $region28: #{conv2d_bn_relu.2} parent=23 // pred_fallthru
            _
          %214 = vnop
        $region24: #{conv2d_bn_relu.2} parent=19 // pred_fallthru
          _
      $region20: #{conv2d_bn_relu.2} parent=5 // pred_fallthru
        _
      %p215 = scmp.le.s32.totalorder 1, %s10
      %p216 = scmp.lt.s32.totalorder %s10, 5
      %p217 = pnand %p215, %p216
      %p218 = pneg %p217
      // Predicated region
      $region62: #{conv2d_bn_relu.2} parent=5 // pred_check
        _
      $region63: #{conv2d_bn_relu.2} parent=5 // pred_check_branch
        %220 = sbr.rel (%p217) target = $region65
      $region64: #{conv2d_bn_relu.2} parent=5 // pred_region
        %s221 = ssub.s32 %s10, 1
        %s222 = sand.u32 %s37, 1
        %s223 = sand.u32 %s37, 1
        %s224 = smul.addr %s223, 20
        %s225 = scalar_lea.vmem [#allocation2], %s224
        // Predicated region
        $region66: #{conv2d_bn_relu.2} parent=64 // pred_check
          %p226 = pneg %p50
        $region67: #{conv2d_bn_relu.2} parent=64 // pred_check_branch
          %228 = sbr.rel (%p226) target = $region69
        $region68: #{conv2d_bn_relu.2} parent=64 // pred_region
          _
        $region69: #{conv2d_bn_relu.2} parent=64 // pred_fallthru
          _
        %s229 = sand.u32 %s37, 1
        %s230 = sand.u32 %s37, 1
        %s231 = smul.addr %s230, 20
        %s232 = scalar_lea.vmem [#allocation2], %s231
        %p233 = pneg %p50
        %p234 = pneg %p47
        %p235 = pneg %p71
        %p236 = pneg %p68
        %p237 = pneg %p99
        %p238 = pneg %p96
        %p239 = scmp.lt.s32.totalorder %s19, 1
        %s240 = scalar_select %p239, %s19, 1
        %p241 = scmp.lt.s32.totalorder %s20, 1
        %s242 = scalar_select %p241, %s20, 1
        %s243 = smul.addr %s242, 8
        %s244 = smul.addr %s240, 16
        %s245 = sadd.s32 %s243, %s244
        %s246 = smul.addr %s245, 8
        %s247 = scalar_lea.vmem %s2, %s246
        %p248 = pneg %p127
        %p249 = pneg %p124
        %p250 = scmp.lt.s32.totalorder %s19, 1
        %s251 = scalar_select %p250, %s19, 1
        %p252 = scmp.lt.s32.totalorder %s20, 1
        %s253 = scalar_select %p252, %s20, 1
        %s254 = smul.addr %s253, 8
        %s255 = smul.addr %s251, 16
        %s256 = sadd.s32 %s254, %s255
        %s257 = smul.addr %s256, 8
        %s258 = scalar_lea.vmem %s3, %s257
        %p259 = scmp.lt.s32.totalorder %s19, 1
        %s260 = scalar_select %p259, %s19, 1
        %p261 = scmp.lt.s32.totalorder %s20, 1
        %s262 = scalar_select %p261, %s20, 1
        %s263 = smul.addr %s262, 8
        %s264 = smul.addr %s260, 16
        %s265 = sadd.s32 %s263, %s264
        %s266 = smul.addr %s265, 8
        %s267 = scalar_lea.vmem %s2, %s266
        %p268 = scmp.lt.s32.totalorder %s19, 1
        %s269 = scalar_select %p268, %s19, 1
        %p270 = scmp.lt.s32.totalorder %s20, 1
        %s271 = scalar_select %p270, %s20, 1
        %s272 = smul.addr %s271, 8
        %s273 = smul.addr %s269, 16
        %s274 = sadd.s32 %s272, %s273
        %s275 = smul.addr %s274, 8
        %s276 = scalar_lea.vmem %s3, %s275
        %v278 = vld [vmem:[%s1] sm:$0xf]
        %v279 = vld [vmem:[%s1 + $0x4] sm:$0xf]
        %v280 = vld [vmem:[%s1 + $0x8] sm:$0xf]
        %v281 = vld [vmem:[%s1 + $0xc] sm:$0xf]
        %v282 = vld [vmem:[%s1 + $0x10] sm:$0xf]
        %v283 = vld [vmem:[%s1 + $0x14] sm:$0xf]
        %v284 = vld [vmem:[%s1 + $0x18] sm:$0xf]
        %v285 = vld [vmem:[%s1 + $0x1c] sm:$0xf]
        %v286 = vld [vmem:[%s225] sm:$0xf]
        %v287 = vld [vmem:[%s225 + $0x4] sm:$0xf]
        %v288 = vld [vmem:[%s225 + $0x8] sm:$0xf]
        %v289 = vld [vmem:[%s225 + $0xc] sm:$0xf]
        %v290 = vld [vmem:[%s225 + $0x10] sm:$0x3]
        %v299 = vunpack.c.l.b16 %v278
        %v300 = vunpack.c.l.b16 %v279
        %v301 = vunpack.c.l.b16 %v280
        %v302 = vunpack.c.l.b16 %v281
        %v303 = vunpack.c.l.b16 %v282
        %v304 = vunpack.c.l.b16 %v283
        %v305 = vunpack.c.l.b16 %v284
        %v306 = vunpack.c.l.b16 %v285
        %v307 = vpack.c.b16 %v300, %v299
        %v308 = vpack.c.b16 %v302, %v301
        %v309 = vpack.c.b16 %v304, %v303
        %v310 = vpack.c.b16 %v306, %v305
        %v316 = vunpack.c.l.b16 %v286
        %v317 = vunpack.c.l.b16 %v287
        %v318 = vunpack.c.l.b16 %v288
        %v319 = vunpack.c.l.b16 %v289
        %v320 = vunpack.c.l.b16 %v290
        %v321 = vpack.c.b16 %v317, %v316
        %v322 = vpack.c.b16 %v319, %v318
        %v323 = vpack.c.b16 %v320, %v320
        %vm326 = vcmask 293888
        %v328 = vsel %vm326, %v307, 0
        %v331 = vsel %vm326, %v308, 0
        %v334 = vsel %vm326, %v309, 0
        %v337 = vsel %vm326, %v310, 0
        %vm339 = vcmask 1041408
        %v341 = vsel %vm339, %v323, 0
        %343 = vmatprep.subr.bf16.mxu0 0
        %344 = vmatpush1.bf16.msra.mxu0 %v321
        %345 = vmatprep.subr.bf16.mxu0 0
        %346 = vmatpush1.bf16.msra.mxu0 %v322
        %347 = vmatprep.subr.bf16.mxu0 0
        %348 = vmatpush1.bf16.msra.mxu0 %v341
        %349 = vmatprep.subr.bf16.mxu0 0
        %350 = vmatpush1.bf16.msra.mxu0 0
        %351 = vmatprep.subr.bf16.mxu0 0
        %352 = vmatpush1.bf16.msra.mxu0 0
        %353 = vmatprep.subr.bf16.mxu0 0
        %354 = vmatpush1.bf16.msra.mxu0 0
        %355 = vmatprep.subr.bf16.mxu0 0
        %356 = vmatpush1.bf16.msra.mxu0 0
        %357 = vmatprep.subr.bf16.mxu0 0
        %358 = vmatpush1.bf16.msra.mxu0 0
        %359 = vmatprep.subr.bf16.mxu0 0
        %360 = vmatpush1.bf16.msra.mxu0 0
        %361 = vmatprep.subr.bf16.mxu0 0
        %362 = vmatpush1.bf16.msra.mxu0 0
        %363 = vmatprep.subr.bf16.mxu0 0
        %364 = vmatpush1.bf16.msra.mxu0 0
        %365 = vmatprep.subr.bf16.mxu0 0
        %366 = vmatpush1.bf16.msra.mxu0 0
        %367 = vmatprep.subr.bf16.mxu0 0
        %368 = vmatpush1.bf16.msra.mxu0 0
        %369 = vmatprep.subr.bf16.mxu0 0
        %370 = vmatpush1.bf16.msra.mxu0 0
        %371 = vmatprep.subr.bf16.mxu0 0
        %372 = vmatpush1.bf16.msra.mxu0 0
        %373 = vmatprep.subr.bf16.mxu0 0
        %374 = vmatpush1.bf16.msra.mxu0 0
        %375 = vmatprep.mubr.bf16.mxu0 0
        %376 = vmatmul.mubr.bf16.gmra.mrb[0].mxu0 %v328
        %v377 = vpop.f32.mrb[0].mxu0
        %v378 = vadd.f32 0.0, %v377
        %v379 = vpop.f32.mrb[0].mxu0
        %v380 = vpop.f32.mrb[0].mxu0
        %v381 = vadd.f32 0.0, %v380
        %v382 = vpop.f32.mrb[0].mxu0
        %383 = vmatprep.mubr.bf16.mxu0 0
        %384 = vmatmul.mubr.bf16.gmra.mrb[0].mxu0 %v331
        %v385 = vpop.f32.mrb[0].mxu0
        %v386 = vadd.f32 0.0, %v385
        %v387 = vpop.f32.mrb[0].mxu0
        %v388 = vpop.f32.mrb[0].mxu0
        %v389 = vadd.f32 0.0, %v388
        %v390 = vpop.f32.mrb[0].mxu0
        %391 = vmatprep.mubr.bf16.mxu0 0
        %392 = vmatmul.mubr.bf16.gmra.mrb[0].mxu0 %v334
        %v393 = vpop.f32.mrb[0].mxu0
        %v394 = vadd.f32 0.0, %v393
        %v395 = vpop.f32.mrb[0].mxu0
        %v396 = vpop.f32.mrb[0].mxu0
        %v397 = vadd.f32 0.0, %v396
        %v398 = vpop.f32.mrb[0].mxu0
        %399 = vmatprep.mubr.bf16.mxu0 0
        %400 = vmatmul.mubr.bf16.gmra.mrb[0].mxu0 %v337
        %v401 = vpop.f32.mrb[0].mxu0
        %v402 = vadd.f32 0.0, %v401
        %v403 = vpop.f32.mrb[0].mxu0
        %v404 = vpop.f32.mrb[0].mxu0
        %v405 = vadd.f32 0.0, %v404
        %v406 = vpop.f32.mrb[0].mxu0
        %407 = vdwg.mxu0
        %408 = vadd.xlane.f32.xlu0 %v378
        %v409 = vpop.xlane.xlu0 %408
        %410 = vadd.xlane.f32.xlu0 %v381
        %v411 = vpop.xlane.xlu0 %410
        %412 = vadd.xlane.f32.xlu0 %v386
        %v413 = vpop.xlane.xlu0 %412
        %414 = vadd.xlane.f32.xlu0 %v389
        %v415 = vpop.xlane.xlu0 %414
        %416 = vadd.xlane.f32.xlu0 %v394
        %v417 = vpop.xlane.xlu0 %416
        %418 = vadd.xlane.f32.xlu0 %v397
        %v419 = vpop.xlane.xlu0 %418
        %420 = vadd.xlane.f32.xlu0 %v402
        %v421 = vpop.xlane.xlu0 %420
        %422 = vadd.xlane.f32.xlu0 %v405
        %v423 = vpop.xlane.xlu0 %422
        %v424 = vmul.f32 %v409, 0.0078125
        %v425 = vmul.f32 %v411, 0.0078125
        %v426 = vmul.f32 %v413, 0.0078125
        %v427 = vmul.f32 %v415, 0.0078125
        %v428 = vmul.f32 %v417, 0.0078125
        %v429 = vmul.f32 %v419, 0.0078125
        %v430 = vmul.f32 %v421, 0.0078125
        %v431 = vmul.f32 %v423, 0.0078125
        %v432 = vsub.f32 %v378, %v424
        %v433 = vsub.f32 %v381, %v425
        %v434 = vsub.f32 %v386, %v426
        %v435 = vsub.f32 %v389, %v427
        %v436 = vsub.f32 %v394, %v428
        %v437 = vsub.f32 %v397, %v429
        %v438 = vsub.f32 %v402, %v430
        %v439 = vsub.f32 %v405, %v431
        %vm440 = vcmask 7168
        %441 = vst.msk [vmem:[%s267] sm:$0xff] %vm440, %v409
        %442 = vst.msk [vmem:[%s267 + $0x8] sm:$0xff] %vm440, %v411
        %443 = vst.msk [vmem:[%s267 + $0x10] sm:$0xff] %vm440, %v413
        %444 = vst.msk [vmem:[%s267 + $0x18] sm:$0xff] %vm440, %v415
        %445 = vst.msk [vmem:[%s267 + $0x20] sm:$0xff] %vm440, %v417
        %446 = vst.msk [vmem:[%s267 + $0x28] sm:$0xff] %vm440, %v419
        %447 = vst.msk [vmem:[%s267 + $0x30] sm:$0xff] %vm440, %v421
        %448 = vst.msk [vmem:[%s267 + $0x38] sm:$0xff] %vm440, %v423
        %v449 = vmul.f32 %v432, %v432
        %v450 = vmul.f32 %v433, %v433
        %v451 = vmul.f32 %v434, %v434
        %v452 = vmul.f32 %v435, %v435
        %v453 = vmul.f32 %v436, %v436
        %v454 = vmul.f32 %v437, %v437
        %v455 = vmul.f32 %v438, %v438
        %v456 = vmul.f32 %v439, %v439
        %457 = vadd.xlane.f32.xlu0 %v449
        %v458 = vpop.xlane.xlu0 %457
        %459 = vadd.xlane.f32.xlu0 %v450
        %v460 = vpop.xlane.xlu0 %459
        %461 = vadd.xlane.f32.xlu0 %v451
        %v462 = vpop.xlane.xlu0 %461
        %463 = vadd.xlane.f32.xlu0 %v452
        %v464 = vpop.xlane.xlu0 %463
        %465 = vadd.xlane.f32.xlu0 %v453
        %v466 = vpop.xlane.xlu0 %465
        %467 = vadd.xlane.f32.xlu0 %v454
        %v468 = vpop.xlane.xlu0 %467
        %469 = vadd.xlane.f32.xlu0 %v455
        %v470 = vpop.xlane.xlu0 %469
        %471 = vadd.xlane.f32.xlu0 %v456
        %v472 = vpop.xlane.xlu0 %471
        %473 = vst.msk [vmem:[%s276] sm:$0xff] %vm440, %v458
        %474 = vst.msk [vmem:[%s276 + $0x8] sm:$0xff] %vm440, %v460
        %475 = vst.msk [vmem:[%s276 + $0x10] sm:$0xff] %vm440, %v462
        %476 = vst.msk [vmem:[%s276 + $0x18] sm:$0xff] %vm440, %v464
        %477 = vst.msk [vmem:[%s276 + $0x20] sm:$0xff] %vm440, %v466
        %478 = vst.msk [vmem:[%s276 + $0x28] sm:$0xff] %vm440, %v468
        %479 = vst.msk [vmem:[%s276 + $0x30] sm:$0xff] %vm440, %v470
        %480 = vst.msk [vmem:[%s276 + $0x38] sm:$0xff] %vm440, %v472
        %p481 = scmp.lt.s32.totalorder %s19, 1
        %s482 = scalar_select %p481, %s19, 1
        %p483 = scmp.lt.s32.totalorder %s20, 1
        %s484 = scalar_select %p483, %s20, 1
        %s485 = smul.addr %s484, 8
        %s486 = smul.addr %s482, 16
        %s487 = sadd.s32 %s485, %s486
        %s488 = smul.addr %s487, 8
        %s489 = scalar_lea.vmem %s2, %s488
        %p490 = scmp.lt.s32.totalorder %s19, 1
        %s491 = scalar_select %p490, %s19, 1
        %p492 = scmp.lt.s32.totalorder %s20, 1
        %s493 = scalar_select %p492, %s20, 1
        %s494 = smul.addr %s493, 8
        %s495 = smul.addr %s491, 16
        %s496 = sadd.s32 %s494, %s495
        %s497 = smul.addr %s496, 8
        %s498 = scalar_lea.vmem %s3, %s497
        // Predicated region
        $region70: #{conv2d_bn_relu.2} parent=64 // pred_check
          %p499 = pneg %p96
        $region71: #{conv2d_bn_relu.2} parent=64 // pred_check_branch
          %501 = sbr.rel (%p499) target = $region73
        $region72: #{conv2d_bn_relu.2} parent=64 // pred_region
          _
        $region73: #{conv2d_bn_relu.2} parent=64 // pred_fallthru
          _
        // Predicated region
        $region74: #{conv2d_bn_relu.2} parent=64 // pred_check
          %p502 = pneg %p124
        $region75: #{conv2d_bn_relu.2} parent=64 // pred_check_branch
          %504 = sbr.rel (%p502) target = $region77
        $region76: #{conv2d_bn_relu.2} parent=64 // pred_region
          _
        $region77: #{conv2d_bn_relu.2} parent=64 // pred_fallthru
          _
      $region65: #{conv2d_bn_relu.2} parent=5 // pred_fallthru
        _
      %p505 = scmp.le.s32.totalorder 2, %s10
      // Predicated region
      $region78: #{conv2d_bn_relu.2} parent=5 // pred_check
        %p506 = pneg %p505
      $region79: #{conv2d_bn_relu.2} parent=5 // pred_check_branch
        %508 = sbr.rel (%p506) target = $region81
      $region80: #{conv2d_bn_relu.2} parent=5 // pred_region
        %s509 = ssub.s32 %s10, 2
        // Predicated region
        $region82: #{conv2d_bn_relu.2} parent=80 // pred_check
          %p510 = pneg %p102
        $region83: #{conv2d_bn_relu.2} parent=80 // pred_check_branch
          %512 = sbr.rel (%p510) target = $region85
        $region84: #{conv2d_bn_relu.2} parent=80 // pred_region
          %p513 = scmp.lt.s32.totalorder %s21, 1
          %s514 = scalar_select %p513, %s21, 1
          %p515 = scmp.lt.s32.totalorder %s22, 1
          %s516 = scalar_select %p515, %s22, 1
          %s517 = smul.addr %s516, 8
          %s518 = smul.addr %s514, 16
          %s519 = sadd.s32 %s517, %s518
          %s520 = smul.addr %s519, 8
          %s521 = scalar_lea.vmem %s2, %s520
        $region85: #{conv2d_bn_relu.2} parent=80 // pred_fallthru
          _
        // Predicated region
        $region86: #{conv2d_bn_relu.2} parent=80 // pred_check
          %p522 = pneg %p130
        $region87: #{conv2d_bn_relu.2} parent=80 // pred_check_branch
          %524 = sbr.rel (%p522) target = $region89
        $region88: #{conv2d_bn_relu.2} parent=80 // pred_region
          %p525 = scmp.lt.s32.totalorder %s21, 1
          %s526 = scalar_select %p525, %s21, 1
          %p527 = scmp.lt.s32.totalorder %s22, 1
          %s528 = scalar_select %p527, %s22, 1
          %s529 = smul.addr %s528, 8
          %s530 = smul.addr %s526, 16
          %s531 = sadd.s32 %s529, %s530
          %s532 = smul.addr %s531, 8
          %s533 = scalar_lea.vmem %s3, %s532
        $region89: #{conv2d_bn_relu.2} parent=80 // pred_fallthru
          _
      $region81: #{conv2d_bn_relu.2} parent=5 // pred_fallthru
        _
    $region6: #{conv2d_bn_relu.2} parent=1 // loop_footer
      %s14 = sadd.s32 1, %s10
    $region7: #{conv2d_bn_relu.2} parent=1 // loop_footer_branch
      %9 = sbr.rel target = $region3
    $region8: #{conv2d_bn_relu.2} parent=1 // loop_exit
      _

// kernel: conv2d_bn_relu.3
$region0: #{conv2d_bn_relu.3}
  #allocation0 [shape = 'u32[]', space=smem, size = 0x4, offset = 0x4, fixed_abs, tag = 'smem constant byte address 0x4 - core index']
  #allocation1 [shape = 'u32[144,128]{1,0:T(1,128)}', space=vmem, size = 0x12000, scoped, tag = 'internal scratch']
  %s0 = inlined_call_operand.vmem [shape: bf16[2,36,256], index: 0, kind: input, shape index: {}]
  %s1 = inlined_call_operand.vmem [shape: bf16[64,36], index: 1, kind: input, shape index: {}]
  %s2 = inlined_call_operand.vmem [shape: f32[64,1], index: 2, kind: input, shape index: {}]
  %s3 = inlined_call_operand.vmem [shape: f32[64,1], index: 3, kind: input, shape index: {}]
  %s4 = inlined_call_operand.vmem [shape: f32[2,64,256], index: 4, kind: output, shape index: {}]
  %s5 = sld [smem:[#allocation0]]
  $region124: #{conv2d_bn_relu.3} parent=0
    _
  %s7 = ssub.s32 1, %s5
  %s8 = scalar_select 0, %s7, %s5
  $region1: #{conv2d_bn_relu.3} parent=0
    #allocation2 [shape = 'u8[20480]{0}', space=vmem, size = 0x5000, scoped, tag = 'input window, operand 0']
    #allocation3 [shape = 'u8[65536]{0}', space=vmem, size = 0x10000, scoped, tag = 'output window, operand 0']
    loop: start=0, step=1, limit=6
    $region2: #{conv2d_bn_relu.3} parent=1 // loop_pre_header
      _
    $region3: #{conv2d_bn_relu.3} parent=1 // loop_header
      %s10 = sphi 0, %s14
      %p11 = scmp.ge.s32.totalorder %s10, 6
      %s17 = sphi 0, %s29
      %s18 = sphi 0, %s25
      %s19 = sphi 0, %s17
      %s20 = sphi 0, %s18
      %s21 = sphi 0, %s19
      %s22 = sphi 0, %s20
      %s34 = sphi 0, %s36
      %s37 = sphi 0, %s34
      %s38 = sphi 0, %s37
      %s54 = sphi 0, %s38
      %s58 = sphi 0, %s58
      %s60 = sphi 0, %s58
      %s61 = sphi 0, %s60
      %s75 = sphi 0, %s61
      %s79 = sphi 0, %s79
      %s81 = sphi 0, %s79
      %s82 = sphi 0, %s81
      %s96 = sphi 0, %s82
      %s100 = sphi 0, %s100
      %s102 = sphi 0, %s100
      %s103 = sphi 0, %s102
      %s117 = sphi 0, %s103
      %s125 = sphi 0, %s127
      %s128 = sphi 0, %s125
      %s129 = sphi 0, %s128
      %s145 = sphi 0, %s129
    $region4: #{conv2d_bn_relu.3} parent=1 // loop_header_branch
      %13 = sbr.rel (%p11) target = $region8
    $region5: #{conv2d_bn_relu.3} parent=1 // loop_body
      %s15 = ssub.s32 %s10, 1
      %s16 = ssub.s32 %s10, 2
      %s23 = sadd.s32 1, %s18
      %p24 = scmp.ge.s32.totalorder %s23, 2
      %s25 = scalar_select %p24, 0, %s23
      %s26 = sadd.s32 1, %s17
      %s27 = scalar_select %p24, %s26, %s17
      %p28 = scmp.ge.s32.totalorder %s27, 2
      %s29 = scalar_select %p28, 0, %s27
      %s30 = ssub.s32 %s17, %s29
      %s31 = ssub.s32 %s18, %s25
      %s32 = sor.u32 %s30, %s31
      %p33 = scmp.eq.s32.totalorder %s32, 0
      %s35 = sadd.s32 %s34, 1
      %s36 = scalar_select %p33, %s34, %s35
      %p39 = pneg %p33
      %p40 = scmp.eq.s32.totalorder %s10, 3
      %p41 = por %p39, %p40
      %p42 = scmp.ne.s32.totalorder %s34, %s37
      %p43 = scmp.eq.s32.totalorder %s10, 0
      %p44 = por %p42, %p43
      %p45 = scmp.ne.s32.totalorder %s34, %s37
      %p46 = scmp.eq.s32.totalorder %s15, 3
      %p47 = por %p45, %p46
      %p48 = scmp.ne.s32.totalorder %s37, %s38
      %p49 = scmp.eq.s32.totalorder %s15, 0
      %p50 = por %p48, %p49
      %p51 = scmp.ne.s32.totalorder %s37, %s38
      %p52 = scmp.eq.s32.totalorder %s16, 3
      %p53 = por %p51, %p52
      %p55 = scmp.ne.s32.totalorder %s38, %s54
      %p56 = scmp.eq.s32.totalorder %s16, 0
      %p57 = por %p55, %p56
      %s59 = sadd.s32 %s58, 1
      %p62 = scmp.eq.s32.totalorder %s10, 3
      %p63 = scmp.ne.s32.totalorder %s58, %s60
      %p64 = scmp.eq.s32.totalorder %s10, 0
      %p65 = por %p63, %p64
      %p66 = scmp.ne.s32.totalorder %s58, %s60
      %p67 = scmp.eq.s32.totalorder %s15, 3
      %p68 = por %p66, %p67
      %p69 = scmp.ne.s32.totalorder %s60, %s61
      %p70 = scmp.eq.s32.totalorder %s15, 0
      %p71 = por %p69, %p70
      %p72 = scmp.ne.s32.totalorder %s60, %s61
      %p73 = scmp.eq.s32.totalorder %s16, 3
      %p74 = por %p72, %p73
      %p76 = scmp.ne.s32.totalorder %s61, %s75
      %p77 = scmp.eq.s32.totalorder %s16, 0
      %p78 = por %p76, %p77
      %s80 = sadd.s32 %s79, 1
      %p83 = scmp.eq.s32.totalorder %s10, 3
      %p84 = scmp.ne.s32.totalorder %s79, %s81
      %p85 = scmp.eq.s32.totalorder %s10, 0
      %p86 = por %p84, %p85
      %p87 = scmp.ne.s32.totalorder %s79, %s81
      %p88 = scmp.eq.s32.totalorder %s15, 3
      %p89 = por %p87, %p88
      %p90 = scmp.ne.s32.totalorder %s81, %s82
      %p91 = scmp.eq.s32.totalorder %s15, 0
      %p92 = por %p90, %p91
      %p93 = scmp.ne.s32.totalorder %s81, %s82
      %p94 = scmp.eq.s32.totalorder %s16, 3
      %p95 = por %p93, %p94
      %p97 = scmp.ne.s32.totalorder %s82, %s96
      %p98 = scmp.eq.s32.totalorder %s16, 0
      %p99 = por %p97, %p98
      %s101 = sadd.s32 %s100, 1
      %p104 = scmp.eq.s32.totalorder %s10, 3
      %p105 = scmp.ne.s32.totalorder %s100, %s102
      %p106 = scmp.eq.s32.totalorder %s10, 0
      %p107 = por %p105, %p106
      %p108 = scmp.ne.s32.totalorder %s100, %s102
      %p109 = scmp.eq.s32.totalorder %s15, 3
      %p110 = por %p108, %p109
      %p111 = scmp.ne.s32.totalorder %s102, %s103
      %p112 = scmp.eq.s32.totalorder %s15, 0
      %p113 = por %p111, %p112
      %p114 = scmp.ne.s32.totalorder %s102, %s103
      %p115 = scmp.eq.s32.totalorder %s16, 3
      %p116 = por %p114, %p115
      %p118 = scmp.ne.s32.totalorder %s103, %s117
      %p119 = scmp.eq.s32.totalorder %s16, 0
      %p120 = por %p118, %p119
      %s121 = ssub.s32 %s17, %s29
      %s122 = ssub.s32 %s18, %s25
      %s123 = sor.u32 %s121, %s122
      %p124 = scmp.eq.s32.totalorder %s123, 0
      %s126 = sadd.s32 %s125, 1
      %s127 = scalar_select %p124, %s125, %s126
      %p130 = pneg %p124
      %p131 = scmp.eq.s32.totalorder %s10, 3
      %p132 = por %p130, %p131
      %p133 = scmp.ne.s32.totalorder %s125, %s128
      %p134 = scmp.eq.s32.totalorder %s10, 0
      %p135 = por %p133, %p134
      %p136 = scmp.ne.s32.totalorder %s125, %s128
      %p137 = scmp.eq.s32.totalorder %s15, 3
      %p138 = por %p136, %p137
      %p139 = scmp.ne.s32.totalorder %s128, %s129
      %p140 = scmp.eq.s32.totalorder %s15, 0
      %p141 = por %p139, %p140
      %p142 = scmp.ne.s32.totalorder %s128, %s129
      %p143 = scmp.eq.s32.totalorder %s16, 3
      %p144 = por %p142, %p143
      %p146 = scmp.ne.s32.totalorder %s129, %s145
      %p147 = scmp.eq.s32.totalorder %s16, 0
      %p148 = por %p146, %p147
      %p149 = scmp.le.s32.totalorder 1, %s10
      %p150 = scmp.lt.s32.totalorder %s10, 5
      %p151 = pnand %p149, %p150
      %p152 = pneg %p151
      // Predicated region
      $region9: #{conv2d_bn_relu.3} parent=5 // pred_check
        _
      $region10: #{conv2d_bn_relu.3} parent=5 // pred_check_branch
        %154 = sbr.rel (%p151) target = $region12
      $region11: #{conv2d_bn_relu.3} parent=5 // pred_region
        %s155 = ssub.s32 %s10, 1
        // Predicated region
        $region13: #{conv2d_bn_relu.3} parent=11 // pred_check
          %p156 = pneg %p71
        $region14: #{conv2d_bn_relu.3} parent=11 // pred_check_branch
          %158 = sbr.rel (%p156) target = $region16
        $region15: #{conv2d_bn_relu.3} parent=11 // pred_region
          _
        $region16: #{conv2d_bn_relu.3} parent=11 // pred_fallthru
          _
        // Predicated region
        $region17: #{conv2d_bn_relu.3} parent=11 // pred_check
          %p159 = pneg %p92
        $region18: #{conv2d_bn_relu.3} parent=11 // pred_check_branch
          %161 = sbr.rel (%p159) target = $region20
        $region19: #{conv2d_bn_relu.3} parent=11 // pred_region
          _
        $region20: #{conv2d_bn_relu.3} parent=11 // pred_fallthru
          _
        // Predicated region
        $region21: #{conv2d_bn_relu.3} parent=11 // pred_check
          %p162 = pneg %p113
        $region22: #{conv2d_bn_relu.3} parent=11 // pred_check_branch
          %164 = sbr.rel (%p162) target = $region24
        $region23: #{conv2d_bn_relu.3} parent=11 // pred_region
          _
        $region24: #{conv2d_bn_relu.3} parent=11 // pred_fallthru
          _
      $region12: #{conv2d_bn_relu.3} parent=5 // pred_fallthru
        _
      %p165 = scmp.lt.s32.totalorder %s10, 4
      // Predicated region
      $region25: #{conv2d_bn_relu.3} parent=5 // pred_check
        %p166 = pneg %p165
      $region26: #{conv2d_bn_relu.3} parent=5 // pred_check_branch
        %168 = sbr.rel (%p166) target = $region28
      $region27: #{conv2d_bn_relu.3} parent=5 // pred_region
        // Predicated region
        $region29: #{conv2d_bn_relu.3} parent=27 // pred_check
          %p169 = pneg %p44
        $region30: #{conv2d_bn_relu.3} parent=27 // pred_check_branch
          %171 = sbr.rel (%p169) target = $region32
        $region31: #{conv2d_bn_relu.3} parent=27 // pred_region
          %s172 = sand.u32 %s34, 1
          %s173 = sand.u32 %s34, 1
          %s174 = smul.addr %s173, 20
          %s175 = scalar_lea.vmem [#allocation2], %s174
          %s176 = smul.addr %s17, 10
          %s177 = sadd.s32 %s18, %s176
          %s178 = smul.addr %s177, 4
          %s179 = scalar_lea.vmem %s0, %s178
          // Predicated region
          $region33: #{conv2d_bn_relu.3} parent=31 // pred_check
            _
          $region34: #{conv2d_bn_relu.3} parent=31 // pred_check_branch
            %181 = sbr.rel (0) target = $region36
          $region35: #{conv2d_bn_relu.3} parent=31 // pred_region
            // Predicated region
            $region37: #{conv2d_bn_relu.3} parent=35 // pred_check
              _
            $region38: #{conv2d_bn_relu.3} parent=35 // pred_check_branch
              %183 = sbr.rel target = $region40
            $region39: #{conv2d_bn_relu.3} parent=35 // pred_region
              // Predicated region
              $region52: #{conv2d_bn_relu.3} parent=39 // pred_check
                _
              $region53: #{conv2d_bn_relu.3} parent=39 // pred_check_branch
                %206 = sbr.rel (0) target = $region55
              $region54: #{conv2d_bn_relu.3} parent=39 // pred_region
                loop: start=0, step=1, limit=1
                $region56: #{conv2d_bn_relu.3} parent=54 // loop_pre_header
                  _
                $region57: #{conv2d_bn_relu.3} parent=54 // loop_header
                  %s208 = sphi 0, %s212
                  %p209 = scmp.ge.s32.totalorder %s208, 1
                  %s213 = sphi %s179, %s179
                  %s214 = sphi %s175, %s175
                $region58: #{conv2d_bn_relu.3} parent=54 // loop_header_branch
                  %211 = sbr.rel (%p209) target = $region62
                $region59: #{conv2d_bn_relu.3} parent=54 // loop_body
                  _
                $region60: #{conv2d_bn_relu.3} parent=54 // loop_footer
                  %s212 = sadd.s32 1, %s208
                $region61: #{conv2d_bn_relu.3} parent=54 // loop_footer_branch
                  %207 = sbr.rel target = $region57
                $region62: #{conv2d_bn_relu.3} parent=54 // loop_exit
                  _
                loop: start=0, step=1, limit=1
                $region63: #{conv2d_bn_relu.3} parent=54 // loop_pre_header
                  _
                $region64: #{conv2d_bn_relu.3} parent=54 // loop_header
                  %s217 = sphi 0, %s221
                  %p218 = scmp.ge.s32.totalorder %s217, 1
                  %s222 = sphi %s179, %s179
                  %s223 = sphi %s175, %s175
                $region65: #{conv2d_bn_relu.3} parent=54 // loop_header_branch
                  %220 = sbr.rel (%p218) target = $region69
                $region66: #{conv2d_bn_relu.3} parent=54 // loop_body
                  %v224 = vld [vmem:[%s222] sm:$0xf]
                  %225 = vst [vmem:[%s223] sm:$0xf] %v224
                  %v226 = vld [vmem:[%s222 + $0x8] sm:$0xf]
                  %227 = vst [vmem:[%s223 + $0x4] sm:$0xf] %v226
                  %v228 = vld [vmem:[%s222 + $0x10] sm:$0xf]
                  %229 = vst [vmem:[%s223 + $0x8] sm:$0xf] %v228
                  %v230 = vld [vmem:[%s222 + $0x18] sm:$0xf]
                  %231 = vst [vmem:[%s223 + $0xc] sm:$0xf] %v230
                  %v232 = vld [vmem:[%s222 + $0x20] sm:$0xf]
                  %233 = vst [vmem:[%s223 + $0x10] sm:$0xf] %v232
                $region67: #{conv2d_bn_relu.3} parent=54 // loop_footer
                  %s221 = sadd.s32 1, %s217
                $region68: #{conv2d_bn_relu.3} parent=54 // loop_footer_branch
                  %216 = sbr.rel target = $region64
                $region69: #{conv2d_bn_relu.3} parent=54 // loop_exit
                  _
              $region55: #{conv2d_bn_relu.3} parent=39 // pred_fallthru
                _
            $region40: #{conv2d_bn_relu.3} parent=35 // pred_fallthru
              _
            // Predicated region
            $region41: #{conv2d_bn_relu.3} parent=35 // pred_check
              _
            $region42: #{conv2d_bn_relu.3} parent=35 // pred_check_branch
              %185 = sbr.rel (0) target = $region44
            $region43: #{conv2d_bn_relu.3} parent=35 // pred_region
              loop: start=0, step=1, limit=1
              $region45: #{conv2d_bn_relu.3} parent=43 // loop_pre_header
                _
              $region46: #{conv2d_bn_relu.3} parent=43 // loop_header
                %s188 = sphi 0, %s192
                %p189 = scmp.ge.s32.totalorder %s188, 1
                %s193 = sphi %s179, %s179
                %s194 = sphi %s175, %s175
              $region47: #{conv2d_bn_relu.3} parent=43 // loop_header_branch
                %191 = sbr.rel (%p189) target = $region51
              $region48: #{conv2d_bn_relu.3} parent=43 // loop_body
                %v195 = vld [vmem:[%s193] sm:$0xf]
                %196 = vst [vmem:[%s194] sm:$0xf] %v195
                %v197 = vld [vmem:[%s193 + $0x8] sm:$0xf]
                %198 = vst [vmem:[%s194 + $0x4] sm:$0xf] %v197
                %v199 = vld [vmem:[%s193 + $0x10] sm:$0xf]
                %200 = vst [vmem:[%s194 + $0x8] sm:$0xf] %v199
                %v201 = vld [vmem:[%s193 + $0x18] sm:$0xf]
                %202 = vst [vmem:[%s194 + $0xc] sm:$0xf] %v201
                %v203 = vld [vmem:[%s193 + $0x20] sm:$0xf]
                %204 = vst [vmem:[%s194 + $0x10] sm:$0xf] %v203
              $region49: #{conv2d_bn_relu.3} parent=43 // loop_footer
                %s192 = sadd.s32 1, %s188
              $region50: #{conv2d_bn_relu.3} parent=43 // loop_footer_branch
                %187 = sbr.rel target = $region46
              $region51: #{conv2d_bn_relu.3} parent=43 // loop_exit
                _
            $region44: #{conv2d_bn_relu.3} parent=35 // pred_fallthru
              _
          $region36: #{conv2d_bn_relu.3} parent=31 // pred_fallthru
            _
          %234 = vnop
        $region32: #{conv2d_bn_relu.3} parent=27 // pred_fallthru
          _
      $region28: #{conv2d_bn_relu.3} parent=5 // pred_fallthru
        _
      %p235 = scmp.le.s32.totalorder 1, %s10
      %p236 = scmp.lt.s32.totalorder %s10, 5
      %p237 = pnand %p235, %p236
      %p238 = pneg %p237
      // Predicated region
      $region70: #{conv2d_bn_relu.3} parent=5 // pred_check
        _
      $region71: #{conv2d_bn_relu.3} parent=5 // pred_check_branch
        %240 = sbr.rel (%p237) target = $region73
      $region72: #{conv2d_bn_relu.3} parent=5 // pred_region
        %s241 = ssub.s32 %s10, 1
        %s242 = sand.u32 %s37, 1
        %s243 = sand.u32 %s37, 1
        %s244 = smul.addr %s243, 20
        %s245 = scalar_lea.vmem [#allocation2], %s244
        // Predicated region
        $region74: #{conv2d_bn_relu.3} parent=72 // pred_check
          %p246 = pneg %p50
        $region75: #{conv2d_bn_relu.3} parent=72 // pred_check_branch
          %248 = sbr.rel (%p246) target = $region77
        $region76: #{conv2d_bn_relu.3} parent=72 // pred_region
          _
        $region77: #{conv2d_bn_relu.3} parent=72 // pred_fallthru
          _
        %s249 = sand.u32 %s37, 1
        %s250 = sand.u32 %s37, 1
        %s251 = smul.addr %s250, 20
        %s252 = scalar_lea.vmem [#allocation2], %s251
        %p253 = pneg %p50
        %p254 = pneg %p47
        %p255 = pneg %p71
        %p256 = pneg %p68
        %p257 = pneg %p92
        %p258 = pneg %p89
        %p259 = pneg %p113
        %p260 = pneg %p110
        %p261 = pneg %p141
        %p262 = pneg %p138
        %s263 = sand.u32 %s128, 1
        %s264 = sand.u32 %s128, 1
        %s265 = smul.addr %s264, 64
        %s266 = scalar_lea.vmem [#allocation3], %s265
        %v268 = vld [vmem:[%s1] sm:$0xf]
        %v269 = vld [vmem:[%s1 + $0x4] sm:$0xf]
        %v270 = vld [vmem:[%s1 + $0x8] sm:$0xf]
        %v271 = vld [vmem:[%s1 + $0xc] sm:$0xf]
        %v272 = vld [vmem:[%s1 + $0x10] sm:$0xf]
        %v273 = vld [vmem:[%s1 + $0x14] sm:$0xf]
        %v274 = vld [vmem:[%s1 + $0x18] sm:$0xf]
        %v275 = vld [vmem:[%s1 + $0x1c] sm:$0xf]
        %v276 = vld [vmem:[%s245] sm:$0xf]
        %v277 = vld [vmem:[%s245 + $0x4] sm:$0xf]
        %v278 = vld [vmem:[%s245 + $0x8] sm:$0xf]
        %v279 = vld [vmem:[%s245 + $0xc] sm:$0xf]
        %v280 = vld [vmem:[%s245 + $0x10] sm:$0x3]
        %v289 = vunpack.c.l.b16 %v268
        %v290 = vunpack.c.l.b16 %v269
        %v291 = vunpack.c.l.b16 %v270
        %v292 = vunpack.c.l.b16 %v271
        %v293 = vunpack.c.l.b16 %v272
        %v294 = vunpack.c.l.b16 %v273
        %v295 = vunpack.c.l.b16 %v274
        %v296 = vunpack.c.l.b16 %v275
        %v297 = vpack.c.b16 %v290, %v289
        %v298 = vpack.c.b16 %v292, %v291
        %v299 = vpack.c.b16 %v294, %v293
        %v300 = vpack.c.b16 %v296, %v295
        %v306 = vunpack.c.l.b16 %v276
        %v307 = vunpack.c.l.b16 %v277
        %v308 = vunpack.c.l.b16 %v278
        %v309 = vunpack.c.l.b16 %v279
        %v310 = vunpack.c.l.b16 %v280
        %v311 = vpack.c.b16 %v307, %v306
        %v312 = vpack.c.b16 %v309, %v308
        %v313 = vpack.c.b16 %v310, %v310
        %vm316 = vcmask 293888
        %v318 = vsel %vm316, %v297, 0
        %v321 = vsel %vm316, %v298, 0
        %v324 = vsel %vm316, %v299, 0
        %v327 = vsel %vm316, %v300, 0
        %vm329 = vcmask 1041408
        %v331 = vsel %vm329, %v313, 0
        %333 = vmatprep.subr.bf16.mxu0 0
        %334 = vmatpush1.bf16.msra.mxu0 %v311
        %335 = vmatprep.subr.bf16.mxu0 0
        %336 = vmatpush1.bf16.msra.mxu0 %v312
        %337 = vmatprep.subr.bf16.mxu0 0
        %338 = vmatpush1.bf16.msra.mxu0 %v331
        %339 = vmatprep.subr.bf16.mxu0 0
        %340 = vmatpush1.bf16.msra.mxu0 0
        %341 = vmatprep.subr.bf16.mxu0 0
        %342 = vmatpush1.bf16.msra.mxu0 0
        %343 = vmatprep.subr.bf16.mxu0 0
        %344 = vmatpush1.bf16.msra.mxu0 0
        %345 = vmatprep.subr.bf16.mxu0 0
        %346 = vmatpush1.bf16.msra.mxu0 0
        %347 = vmatprep.subr.bf16.mxu0 0
        %348 = vmatpush1.bf16.msra.mxu0 0
        %349 = vmatprep.subr.bf16.mxu0 0
        %350 = vmatpush1.bf16.msra.mxu0 0
        %351 = vmatprep.subr.bf16.mxu0 0
        %352 = vmatpush1.bf16.msra.mxu0 0
        %353 = vmatprep.subr.bf16.mxu0 0
        %354 = vmatpush1.bf16.msra.mxu0 0
        %355 = vmatprep.subr.bf16.mxu0 0
        %356 = vmatpush1.bf16.msra.mxu0 0
        %357 = vmatprep.subr.bf16.mxu0 0
        %358 = vmatpush1.bf16.msra.mxu0 0
        %359 = vmatprep.subr.bf16.mxu0 0
        %360 = vmatpush1.bf16.msra.mxu0 0
        %361 = vmatprep.subr.bf16.mxu0 0
        %362 = vmatpush1.bf16.msra.mxu0 0
        %363 = vmatprep.subr.bf16.mxu0 0
        %364 = vmatpush1.bf16.msra.mxu0 0
        %365 = vmatprep.mubr.bf16.mxu0 0
        %366 = vmatmul.mubr.bf16.gmra.mrb[0].mxu0 %v318
        %v367 = vpop.f32.mrb[0].mxu0
        %v368 = vadd.f32 0.0, %v367
        %v369 = vpop.f32.mrb[0].mxu0
        %v370 = vpop.f32.mrb[0].mxu0
        %v371 = vadd.f32 0.0, %v370
        %v372 = vpop.f32.mrb[0].mxu0
        %373 = vmatprep.mubr.bf16.mxu0 0
        %374 = vmatmul.mubr.bf16.gmra.mrb[0].mxu0 %v321
        %v375 = vpop.f32.mrb[0].mxu0
        %v376 = vadd.f32 0.0, %v375
        %v377 = vpop.f32.mrb[0].mxu0
        %v378 = vpop.f32.mrb[0].mxu0
        %v379 = vadd.f32 0.0, %v378
        %v380 = vpop.f32.mrb[0].mxu0
        %381 = vmatprep.mubr.bf16.mxu0 0
        %382 = vmatmul.mubr.bf16.gmra.mrb[0].mxu0 %v324
        %v383 = vpop.f32.mrb[0].mxu0
        %v384 = vadd.f32 0.0, %v383
        %v385 = vpop.f32.mrb[0].mxu0
        %v386 = vpop.f32.mrb[0].mxu0
        %v387 = vadd.f32 0.0, %v386
        %v388 = vpop.f32.mrb[0].mxu0
        %389 = vmatprep.mubr.bf16.mxu0 0
        %390 = vmatmul.mubr.bf16.gmra.mrb[0].mxu0 %v327
        %v391 = vpop.f32.mrb[0].mxu0
        %v392 = vadd.f32 0.0, %v391
        %v393 = vpop.f32.mrb[0].mxu0
        %v394 = vpop.f32.mrb[0].mxu0
        %v395 = vadd.f32 0.0, %v394
        %v396 = vpop.f32.mrb[0].mxu0
        %397 = vdwg.mxu0
        %v398 = vld [vmem:[%s2] sm:$0xff]
        %v399 = vld [vmem:[%s2 + $0x8] sm:$0xff]
        %v400 = vld [vmem:[%s2 + $0x10] sm:$0xff]
        %v401 = vld [vmem:[%s2 + $0x18] sm:$0xff]
        %v402 = vld [vmem:[%s2 + $0x20] sm:$0xff]
        %v403 = vld [vmem:[%s2 + $0x28] sm:$0xff]
        %v404 = vld [vmem:[%s2 + $0x30] sm:$0xff]
        %v405 = vld [vmem:[%s2 + $0x38] sm:$0xff]
        %407 = vset.pattern.permute.xlu0 0
        %408 = vperm.xlu0 %407, %v398
        %v409 = vpop.permute.xlu0 %408
        %412 = vset.pattern.permute.xlu0 0
        %413 = vperm.xlu0 %412, %v399
        %v414 = vpop.permute.xlu0 %413
        %417 = vset.pattern.permute.xlu0 0
        %418 = vperm.xlu0 %417, %v400
        %v419 = vpop.permute.xlu0 %418
        %422 = vset.pattern.permute.xlu0 0
        %423 = vperm.xlu0 %422, %v401
        %v424 = vpop.permute.xlu0 %423
        %427 = vset.pattern.permute.xlu0 0
        %428 = vperm.xlu0 %427, %v402
        %v429 = vpop.permute.xlu0 %428
        %432 = vset.pattern.permute.xlu0 0
        %433 = vperm.xlu0 %432, %v403
        %v434 = vpop.permute.xlu0 %433
        %437 = vset.pattern.permute.xlu0 0
        %438 = vperm.xlu0 %437, %v404
        %v439 = vpop.permute.xlu0 %438
        %442 = vset.pattern.permute.xlu0 0
        %443 = vperm.xlu0 %442, %v405
        %v444 = vpop.permute.xlu0 %443
        %v446 = vmul.f32 %v368, %v409
        %v447 = vmul.f32 %v371, %v414
        %v448 = vmul.f32 %v376, %v419
        %v449 = vmul.f32 %v379, %v424
        %v450 = vmul.f32 %v384, %v429
        %v451 = vmul.f32 %v387, %v434
        %v452 = vmul.f32 %v392, %v439
        %v453 = vmul.f32 %v395, %v444
        %v454 = vld [vmem:[%s3] sm:$0xff]
        %v455 = vld [vmem:[%s3 + $0x8] sm:$0xff]
        %v456 = vld [vmem:[%s3 + $0x10] sm:$0xff]
        %v457 = vld [vmem:[%s3 + $0x18] sm:$0xff]
        %v458 = vld [vmem:[%s3 + $0x20] sm:$0xff]
        %v459 = vld [vmem:[%s3 + $0x28] sm:$0xff]
        %v460 = vld [vmem:[%s3 + $0x30] sm:$0xff]
        %v461 = vld [vmem:[%s3 + $0x38] sm:$0xff]
        %463 = vset.pattern.permute.xlu0 0
        %464 = vperm.xlu0 %463, %v454
        %v465 = vpop.permute.xlu0 %464
        %468 = vset.pattern.permute.xlu0 0
        %469 = vperm.xlu0 %468, %v455
        %v470 = vpop.permute.xlu0 %469
        %473 = vset.pattern.permute.xlu0 0
        %474 = vperm.xlu0 %473, %v456
        %v475 = vpop.permute.xlu0 %474
        %478 = vset.pattern.permute.xlu0 0
        %479 = vperm.xlu0 %478, %v457
        %v480 = vpop.permute.xlu0 %479
        %483 = vset.pattern.permute.xlu0 0
        %484 = vperm.xlu0 %483, %v458
        %v485 = vpop.permute.xlu0 %484
        %488 = vset.pattern.permute.xlu0 0
        %489 = vperm.xlu0 %488, %v459
        %v490 = vpop.permute.xlu0 %489
        %493 = vset.pattern.permute.xlu0 0
        %494 = vperm.xlu0 %493, %v460
        %v495 = vpop.permute.xlu0 %494
        %498 = vset.pattern.permute.xlu0 0
        %499 = vperm.xlu0 %498, %v461
        %v500 = vpop.permute.xlu0 %499
        %v502 = vadd.f32 %v446, %v465
        %v503 = vadd.f32 %v447, %v470
        %v504 = vadd.f32 %v448, %v475
        %v505 = vadd.f32 %v449, %v480
        %v506 = vadd.f32 %v450, %v485
        %v507 = vadd.f32 %v451, %v490
        %v508 = vadd.f32 %v452, %v495
        %v509 = vadd.f32 %v453, %v500
        %v510 = vmax.f32 %v502, 0.0
        %v511 = vmax.f32 %v503, 0.0
        %v512 = vmax.f32 %v504, 0.0
        %v513 = vmax.f32 %v505, 0.0
        %v514 = vmax.f32 %v506, 0.0
        %v515 = vmax.f32 %v507, 0.0
        %v516 = vmax.f32 %v508, 0.0
        %v517 = vmax.f32 %v509, 0.0
        %518 = vst [vmem:[%s266] sm:$0xff] %v510
        %519 = vst [vmem:[%s266 + $0x8] sm:$0xff] %v511
        %520 = vst [vmem:[%s266 + $0x10] sm:$0xff] %v512
        %521 = vst [vmem:[%s266 + $0x18] sm:$0xff] %v513
        %522 = vst [vmem:[%s266 + $0x20] sm:$0xff] %v514
        %523 = vst [vmem:[%s266 + $0x28] sm:$0xff] %v515
        %524 = vst [vmem:[%s266 + $0x30] sm:$0xff] %v516
        %525 = vst [vmem:[%s266 + $0x38] sm:$0xff] %v517
        %s526 = sand.u32 %s128, 1
        %s527 = sand.u32 %s128, 1
        %s528 = smul.addr %s527, 64
        %s529 = scalar_lea.vmem [#allocation3], %s528
        // Predicated region
        $region78: #{conv2d_bn_relu.3} parent=72 // pred_check
          %p530 = pneg %p138
        $region79: #{conv2d_bn_relu.3} parent=72 // pred_check_branch
          %532 = sbr.rel (%p530) target = $region81
        $region80: #{conv2d_bn_relu.3} parent=72 // pred_region
          %s533 = smul.addr %s19, 16
          %s534 = sadd.s32 %s20, %s533
          %s535 = smul.addr %s534, 8
          %s536 = scalar_lea.vmem %s4, %s535
          // Predicated region
          $region82: #{conv2d_bn_relu.3} parent=80 // pred_check
            _
          $region83: #{conv2d_bn_relu.3} parent=80 // pred_check_branch
            %538 = sbr.rel (0) target = $region85
          $region84: #{conv2d_bn_relu.3} parent=80 // pred_region
            // Predicated region
            $region86: #{conv2d_bn_relu.3} parent=84 // pred_check
              _
            $region87: #{conv2d_bn_relu.3} parent=84 // pred_check_branch
              %540 = sbr.rel (0) target = $region89
            $region88: #{conv2d_bn_relu.3} parent=84 // pred_region
              // Predicated region
              $region101: #{conv2d_bn_relu.3} parent=88 // pred_check
                _
              $region102: #{conv2d_bn_relu.3} parent=88 // pred_check_branch
                %569 = sbr.rel (0) target = $region104
              $region103: #{conv2d_bn_relu.3} parent=88 // pred_region
                loop: start=0, step=1, limit=1
                $region105: #{conv2d_bn_relu.3} parent=103 // loop_pre_header
                  _
                $region106: #{conv2d_bn_relu.3} parent=103 // loop_header
                  %s571 = sphi 0, %s575
                  %p572 = scmp.ge.s32.totalorder %s571, 1
                  %s576 = sphi %s529, %s529
                  %s577 = sphi %s536, %s536
                $region107: #{conv2d_bn_relu.3} parent=103 // loop_header_branch
                  %574 = sbr.rel (%p572) target = $region111
                $region108: #{conv2d_bn_relu.3} parent=103 // loop_body
                  %v578 = vld [vmem:[%s576] sm:$0xff]
                  %579 = vst [vmem:[%s577] sm:$0xff] %v578
                  %v580 = vld [vmem:[%s576 + $0x8] sm:$0xff]
                  %581 = vst [vmem:[%s577 + $0x10] sm:$0xff] %v580
                  %v582 = vld [vmem:[%s576 + $0x10] sm:$0xff]
                  %583 = vst [vmem:[%s577 + $0x20] sm:$0xff] %v582
                  %v584 = vld [vmem:[%s576 + $0x18] sm:$0xff]
                  %585 = vst [vmem:[%s577 + $0x30] sm:$0xff] %v584
                  %v586 = vld [vmem:[%s576 + $0x20] sm:$0xff]
                  %587 = vst [vmem:[%s577 + $0x40] sm:$0xff] %v586
                  %v588 = vld [vmem:[%s576 + $0x28] sm:$0xff]
                  %589 = vst [vmem:[%s577 + $0x50] sm:$0xff] %v588
                  %v590 = vld [vmem:[%s576 + $0x30] sm:$0xff]
                  %591 = vst [vmem:[%s577 + $0x60] sm:$0xff] %v590
                  %v592 = vld [vmem:[%s576 + $0x38] sm:$0xff]
                  %593 = vst [vmem:[%s577 + $0x70] sm:$0xff] %v592
                $region109: #{conv2d_bn_relu.3} parent=103 // loop_footer
                  %s575 = sadd.s32 1, %s571
                $region110: #{conv2d_bn_relu.3} parent=103 // loop_footer_branch
                  %570 = sbr.rel target = $region106
                $region111: #{conv2d_bn_relu.3} parent=103 // loop_exit
                  _
              $region104: #{conv2d_bn_relu.3} parent=88 // pred_fallthru
                _
              // Predicated region
              $region112: #{conv2d_bn_relu.3} parent=88 // pred_check
                _
              $region113: #{conv2d_bn_relu.3} parent=88 // pred_check_branch
                %595 = sbr.rel target = $region115
              $region114: #{conv2d_bn_relu.3} parent=88 // pred_region
                _
              $region115: #{conv2d_bn_relu.3} parent=88 // pred_fallthru
                _
            $region89: #{conv2d_bn_relu.3} parent=84 // pred_fallthru
              _
            // Predicated region
            $region90: #{conv2d_bn_relu.3} parent=84 // pred_check
              _
            $region91: #{conv2d_bn_relu.3} parent=84 // pred_check_branch
              %542 = sbr.rel target = $region93
            $region92: #{conv2d_bn_relu.3} parent=84 // pred_region
              loop: start=0, step=1, limit=1
              $region94: #{conv2d_bn_relu.3} parent=92 // loop_pre_header
                _
              $region95: #{conv2d_bn_relu.3} parent=92 // loop_header
                %s545 = sphi 0, %s549
                %p546 = scmp.ge.s32.totalorder %s545, 1
                %s550 = sphi %s529, %s529
                %s551 = sphi %s536, %s536
              $region96: #{conv2d_bn_relu.3} parent=92 // loop_header_branch
                %548 = sbr.rel (%p546) target = $region100
              $region97: #{conv2d_bn_relu.3} parent=92 // loop_body
                %v552 = vld [vmem:[%s550] sm:$0xff]
                %553 = vst [vmem:[%s551] sm:$0xff] %v552
                %v554 = vld [vmem:[%s550 + $0x8] sm:$0xff]
                %555 = vst [vmem:[%s551 + $0x10] sm:$0xff] %v554
                %v556 = vld [vmem:[%s550 + $0x10] sm:$0xff]
                %557 = vst [vmem:[%s551 + $0x20] sm:$0xff] %v556
                %v558 = vld [vmem:[%s550 + $0x18] sm:$0xff]
                %559 = vst [vmem:[%s551 + $0x30] sm:$0xff] %v558
                %v560 = vld [vmem:[%s550 + $0x20] sm:$0xff]
                %561 = vst [vmem:[%s551 + $0x40] sm:$0xff] %v560
                %v562 = vld [vmem:[%s550 + $0x28] sm:$0xff]
                %563 = vst [vmem:[%s551 + $0x50] sm:$0xff] %v562
                %v564 = vld [vmem:[%s550 + $0x30] sm:$0xff]
                %565 = vst [vmem:[%s551 + $0x60] sm:$0xff] %v564
                %v566 = vld [vmem:[%s550 + $0x38] sm:$0xff]
                %567 = vst [vmem:[%s551 + $0x70] sm:$0xff] %v566
              $region98: #{conv2d_bn_relu.3} parent=92 // loop_footer
                %s549 = sadd.s32 1, %s545
              $region99: #{conv2d_bn_relu.3} parent=92 // loop_footer_branch
                %544 = sbr.rel target = $region95
              $region100: #{conv2d_bn_relu.3} parent=92 // loop_exit
                _
            $region93: #{conv2d_bn_relu.3} parent=84 // pred_fallthru
              _
          $region85: #{conv2d_bn_relu.3} parent=80 // pred_fallthru
            _
          %596 = vnop
        $region81: #{conv2d_bn_relu.3} parent=72 // pred_fallthru
          _
      $region73: #{conv2d_bn_relu.3} parent=5 // pred_fallthru
        _
      %p597 = scmp.le.s32.totalorder 2, %s10
      // Predicated region
      $region116: #{conv2d_bn_relu.3} parent=5 // pred_check
        %p598 = pneg %p597
      $region117: #{conv2d_bn_relu.3} parent=5 // pred_check_branch
        %600 = sbr.rel (%p598) target = $region119
      $region118: #{conv2d_bn_relu.3} parent=5 // pred_region
        %s601 = ssub.s32 %s10, 2
        // Predicated region
        $region120: #{conv2d_bn_relu.3} parent=118 // pred_check
          %p602 = pneg %p144
        $region121: #{conv2d_bn_relu.3} parent=118 // pred_check_branch
          %604 = sbr.rel (%p602) target = $region123
        $region122: #{conv2d_bn_relu.3} parent=118 // pred_region
          %s605 = sand.u32 %s129, 1
          %s606 = sand.u32 %s129, 1
          %s607 = smul.addr %s606, 64
          %s608 = scalar_lea.vmem [#allocation3], %s607
        $region123: #{conv2d_bn_relu.3} parent=118 // pred_fallthru
          _
      $region119: #{conv2d_bn_relu.3} parent=5 // pred_fallthru
        _
    $region6: #{conv2d_bn_relu.3} parent=1 // loop_footer
      %s14 = sadd.s32 1, %s10
    $region7: #{conv2d_bn_relu.3} parent=1 // loop_footer_branch
      %9 = sbr.rel target = $region3
    $region8: #{conv2d_bn_relu.3} parent=1 // loop_exit
      _

</llo_original>
